<compile_context>
chip_gen: v6e
topology: v6e:2x2x1
jax: 0.10.0
libtpu: 0.0.40
codegen_flags: <defaults>
</compile_context>

<pallas_src>
import functools

import jax
import jax.numpy as jnp
from jax.experimental import pallas as pl
from jax.experimental.pallas import tpu as pltpu


def _trigger_kernel(fv_ref, ft_ref, wv_ref, wt_ref, o_ref, *, half_eps):
    # Both matmuls hit the MXU with f32 accumulation. Weights are already in
    # (D, O) layout, so these are plain row-major contractions (no transpose).
    v = jnp.dot(fv_ref[...], wv_ref[...], preferred_element_type=jnp.float32)  # (B, O)
    t = jnp.dot(ft_ref[...], wt_ref[...], preferred_element_type=jnp.float32)  # (B, O)

    # Sigmoid runs on the EUP; the two epsilon/2 scalings are folded into a
    # single multiply after the add (mathematically identical to the module).
    # Epilogue stays in f32 (important on v5e, harmless on v6e/v7x).
    o_ref[...] = ((jax.nn.sigmoid(v) + jax.nn.sigmoid(t)) * half_eps).astype(o_ref.dtype)


def prepare_trigger_weights(w_victim, w_target):
    """Transpose PyTorch Linear weights (O, D) -> kernel layout (D, O).

    Call once at parameter-load time, outside the hot path.
    """
    return jnp.asarray(w_victim).T, jnp.asarray(w_target).T


def trigger_disentangle_forward(feature, wv_t, wt_t, epsilon, C, H, W):
    """feature: (B, 2*D) f32. wv_t / wt_t: (D, O) pre-transposed Linear weights.

    Returns (B, C, H, W) float32, matching the PyTorch module's output.
    """
    B, two_d = feature.shape
    D, O = wv_t.shape
    if two_d != 2 * D:
        raise ValueError(f"feature width {two_d} != 2 * input_dim {2 * D}")
    if wt_t.shape != (D, O):
        raise ValueError(f"target weight shape {wt_t.shape} != {(D, O)}")
    if O != C * H * W:
        raise ValueError(f"out_features {O} != C*H*W {C * H * W}")

    # Lane-aligned feature halves (tiny XLA slices, outside the kernel).
    fv = feature[:, :D]
    ft = feature[:, D:]

    kernel = functools.partial(_trigger_kernel, half_eps=epsilon / 2.0)

    itemsize = 4  # f32
    bytes_accessed = itemsize * (B * 2 * D + 2 * D * O + B * O)

    out_flat = pl.pallas_call(
        kernel,
        out_shape=jax.ShapeDtypeStruct((B, O), jnp.float32),
        in_specs=[
            pl.BlockSpec(memory_space=pltpu.MemorySpace.VMEM),  # fv   (B, D)
            pl.BlockSpec(memory_space=pltpu.MemorySpace.VMEM),  # ft   (B, D)
            pl.BlockSpec(memory_space=pltpu.MemorySpace.VMEM),  # Wv^T (D, O)
            pl.BlockSpec(memory_space=pltpu.MemorySpace.VMEM),  # Wt^T (D, O)
        ],
        out_specs=pl.BlockSpec(memory_space=pltpu.MemorySpace.VMEM),
        cost_estimate=pl.CostEstimate(
            flops=4 * B * D * O,          # two (B,D)x(D,O) matmuls
            transcendentals=2 * B * O,    # two sigmoids over (B, O)
            bytes_accessed=bytes_accessed,
        ),
    )(fv, ft, wv_t, wt_t)

    return out_flat.reshape(B, C, H, W)


def trigger_disentangle_reference(feature, w_victim, w_target, epsilon, C, H, W):
    """Pure-JAX reference in the original PyTorch (O, D) weight layout."""
    B, two_d = feature.shape
    D = two_d // 2
    v = jax.nn.sigmoid(feature[:, :D] @ w_victim.T) * (epsilon / 2.0)
    t = jax.nn.sigmoid(feature[:, D:] @ w_target.T) * (epsilon / 2.0)
    return (v + t).reshape(B, C, H, W)


if __name__ == "__main__":
    # Small shapes consistent with the module's forward:
    #   epsilon=0.2, img_dim C=4, mask_shape (H,W)=(8,8), input_dim D=32
    #   => Linear in=32, out=C*H*W=256; feature has 2*D = 64 columns.
    epsilon = 0.2
    C, H, W = 4, 8, 8
    D = 32
    B = 2
    O = C * H * W

    key = jax.random.PRNGKey(0)
    k_feat, k_wv, k_wt = jax.random.split(key, 3)

    feature = jax.random.normal(k_feat, (B, 2 * D), dtype=jnp.float32)
    # Deterministic synthetic weights, PyTorch Linear layout (out_features, in_features).
    w_victim = jax.random.normal(k_wv, (O, D), dtype=jnp.float32) * 0.05
    w_target = jax.random.normal(k_wt, (O, D), dtype=jnp.float32) * 0.05

    # One-time weight prep (transpose to lane-dense (D, O)), outside the hot path.
    wv_t, wt_t = prepare_trigger_weights(w_victim, w_target)

    out = trigger_disentangle_forward(feature, wv_t, wt_t, epsilon, C, H, W)
    out = jax.block_until_ready(out)

    ref = trigger_disentangle_reference(feature, w_victim, w_target, epsilon, C, H, W)
    assert out.shape == (B, C, H, W)
    assert jnp.allclose(out, ref, atol=1e-5, rtol=1e-5)

    print("KERNEL_OK")
</pallas_src>

<mosaic_0001>
module attributes {stable_mosaic.version = 11 : i64} {
  func.func @_trigger_kernel(%arg0: memref<2x32xf32, #tpu.memory_space<vmem>>, %arg1: memref<2x32xf32, #tpu.memory_space<vmem>>, %arg2: memref<32x256xf32, #tpu.memory_space<vmem>>, %arg3: memref<32x256xf32, #tpu.memory_space<vmem>>, %arg4: memref<2x256xf32, #tpu.memory_space<vmem>>) attributes {dimension_semantics = [], scalar_prefetch = 0 : i64, scratch_operands = 0 : i64, tpu.core_type = #tpu.core_type<tc>} {
    %c0 = arith.constant 0 : index
    %c0_0 = arith.constant 0 : index
    %0 = vector.load %arg0[%c0, %c0_0] : memref<2x32xf32, #tpu.memory_space<vmem>>, vector<2x32xf32>
    %c0_1 = arith.constant 0 : index
    %c0_2 = arith.constant 0 : index
    %1 = vector.load %arg2[%c0_1, %c0_2] : memref<32x256xf32, #tpu.memory_space<vmem>>, vector<32x256xf32>
    %cst = arith.constant dense<0.000000e+00> : vector<2x256xf32>
    %2 = tpu.matmul %0, %1, %cst {dimension_numbers = #tpu.dot_dimension_numbers<[1], [0], [0], [1], [0, 0, 1, 1], [], []>} : vector<2x32xf32>, vector<32x256xf32>, vector<2x256xf32> -> vector<2x256xf32>
    %c0_3 = arith.constant 0 : index
    %c0_4 = arith.constant 0 : index
    %3 = vector.load %arg1[%c0_3, %c0_4] : memref<2x32xf32, #tpu.memory_space<vmem>>, vector<2x32xf32>
    %c0_5 = arith.constant 0 : index
    %c0_6 = arith.constant 0 : index
    %4 = vector.load %arg3[%c0_5, %c0_6] : memref<32x256xf32, #tpu.memory_space<vmem>>, vector<32x256xf32>
    %cst_7 = arith.constant dense<0.000000e+00> : vector<2x256xf32>
    %5 = tpu.matmul %3, %4, %cst_7 {dimension_numbers = #tpu.dot_dimension_numbers<[1], [0], [0], [1], [0, 0, 1, 1], [], []>} : vector<2x32xf32>, vector<32x256xf32>, vector<2x256xf32> -> vector<2x256xf32>
    %6 = arith.negf %2 : vector<2x256xf32>
    %7 = math.exp %6 : vector<2x256xf32>
    %cst_8 = arith.constant 1.000000e+00 : f32
    %8 = vector.broadcast %cst_8 : f32 to vector<2x256xf32>
    %9 = arith.addf %8, %7 : vector<2x256xf32>
    %10 = arith.divf %8, %9 : vector<2x256xf32>
    %11 = arith.negf %5 : vector<2x256xf32>
    %12 = math.exp %11 : vector<2x256xf32>
    %cst_9 = arith.constant 1.000000e+00 : f32
    %13 = vector.broadcast %cst_9 : f32 to vector<2x256xf32>
    %14 = arith.addf %13, %12 : vector<2x256xf32>
    %15 = arith.divf %13, %14 : vector<2x256xf32>
    %16 = arith.addf %10, %15 : vector<2x256xf32>
    %cst_10 = arith.constant 1.000000e-01 : f32
    %17 = vector.broadcast %cst_10 : f32 to vector<2x256xf32>
    %18 = arith.mulf %16, %17 : vector<2x256xf32>
    %c0_11 = arith.constant 0 : index
    %c0_12 = arith.constant 0 : index
    %19 = vector.load %arg4[%c0_11, %c0_12] : memref<2x256xf32, #tpu.memory_space<vmem>>, vector<2x256xf32>
    tpu.vector_store %arg4[%c0_11, %c0_12], %18 {strides = array<i32>} : memref<2x256xf32, #tpu.memory_space<vmem>>, vector<2x256xf32>,
    return
  }
}

</mosaic_0001>

<llo_original>
// kernel: tpu_custom_call.1
$region0: #{tpu_custom_call.1}
  #allocation0 [shape = 'u32[]', space=smem, size = 0x4, offset = 0x4, fixed_abs, tag = 'smem constant byte address 0x4 - core index']
  #allocation1 [shape = 'u32[144,128]{1,0:T(1,128)}', space=vmem, size = 0x12000, scoped, tag = 'internal scratch']
  %s0 = inlined_call_operand.hbm [shape: f32[2,32], index: 0, kind: input, shape index: {}]
  %s1 = inlined_call_operand.hbm [shape: f32[2,32], index: 1, kind: input, shape index: {}]
  %s2 = inlined_call_operand.hbm [shape: f32[32,256], index: 2, kind: input, shape index: {}]
  %s3 = inlined_call_operand.hbm [shape: f32[32,256], index: 3, kind: input, shape index: {}]
  %s4 = inlined_call_operand.hbm [shape: f32[2,256], index: 4, kind: output, shape index: {}]
  %s5 = sld [smem:[#allocation0]]
  $region42: #{tpu_custom_call.1} parent=0
    _
  %s7 = ssub.s32 1, %s5
  %s8 = scalar_select 0, %s7, %s5
  $region1: #{tpu_custom_call.1} parent=0
    #allocation2 [shape = 'u8[1024]{0}', space=vmem, size = 0x400, scoped, tag = 'input window, operand 0, single buffered']
    #allocation3 [shape = 's32[1]{0}', space=sflag, size = 0x4, scoped, tag = 'scoped memory for tpu_custom_call.1']
    #allocation4 [shape = 's32[1]{0}', space=sflag, size = 0x4, scoped, tag = 'scoped memory for tpu_custom_call.1']
    #allocation5 [shape = 'u8[1024]{0}', space=vmem, size = 0x400, scoped, tag = 'input window, operand 1, single buffered']
    #allocation6 [shape = 's32[1]{0}', space=sflag, size = 0x4, scoped, tag = 'scoped memory for tpu_custom_call.1']
    #allocation7 [shape = 'u8[32768]{0}', space=vmem, size = 0x8000, scoped, tag = 'input window, operand 2, single buffered']
    #allocation8 [shape = 'u8[32768]{0}', space=vmem, size = 0x8000, scoped, tag = 'input window, operand 3, single buffered']
    #allocation9 [shape = 's32[1]{0}', space=sflag, size = 0x4, scoped, tag = 'scoped memory for tpu_custom_call.1']
    #allocation10 [shape = 'u8[2048]{0}', space=vmem, size = 0x800, scoped, tag = 'output window, operand 0, single buffered']
    %9 = vsyncpa [#allocation3], 0
    %10 = vsyncpa [#allocation6], 0
    %11 = vsyncpa [#allocation9], 0
    %12 = vsyncpa [#allocation4], 0
    // Predicated region
    $region2: #{tpu_custom_call.1} parent=1 // pred_check
      _
    $region3: #{tpu_custom_call.1} parent=1 // pred_check_branch
      %14 = sbr.rel (0) target = $region5
    $region4: #{tpu_custom_call.1} parent=1 // pred_region
      %s16 = ssub.s32 32, 32
      %17 = vsyncadd [#allocation3], %s16
      %s19 = sshll.u32 [#allocation2], 4
      %s20 = int_to_ptr.vmem [resolvable:$true] %s19
      %22 = dma.hbm_to_vmem [thread:$0]  %s0, 32, %s20, [#allocation3]
    $region5: #{tpu_custom_call.1} parent=1 // pred_fallthru
      _
    // Predicated region
    $region6: #{tpu_custom_call.1} parent=1 // pred_check
      _
    $region7: #{tpu_custom_call.1} parent=1 // pred_check_branch
      %24 = sbr.rel (0) target = $region9
    $region8: #{tpu_custom_call.1} parent=1 // pred_region
      %s26 = ssub.s32 32, 32
      %27 = vsyncadd [#allocation6], %s26
      %s29 = sshll.u32 [#allocation5], 4
      %s30 = int_to_ptr.vmem [resolvable:$true] %s29
      %32 = dma.hbm_to_vmem [thread:$0]  %s1, 32, %s30, [#allocation6]
    $region9: #{tpu_custom_call.1} parent=1 // pred_fallthru
      _
    // Predicated region
    $region10: #{tpu_custom_call.1} parent=1 // pred_check
      _
    $region11: #{tpu_custom_call.1} parent=1 // pred_check_branch
      %34 = sbr.rel (0) target = $region13
    $region12: #{tpu_custom_call.1} parent=1 // pred_region
      %s36 = ssub.s32 1024, 1024
      %37 = vsyncadd [#allocation6], %s36
      %s38 = sshll.u32 [#allocation7], 4
      %s39 = int_to_ptr.vmem [resolvable:$true] %s38
      %44 = dma.hbm_to_vmem [thread:$0]  %s2, 1024, %s39, [#allocation6], 256, 256, 16
    $region13: #{tpu_custom_call.1} parent=1 // pred_fallthru
      _
    // Predicated region
    $region14: #{tpu_custom_call.1} parent=1 // pred_check
      _
    $region15: #{tpu_custom_call.1} parent=1 // pred_check_branch
      %46 = sbr.rel (0) target = $region17
    $region16: #{tpu_custom_call.1} parent=1 // pred_region
      %s48 = ssub.s32 1024, 1024
      %49 = vsyncadd [#allocation9], %s48
      %s50 = sshll.u32 [#allocation8], 4
      %s51 = int_to_ptr.vmem [resolvable:$true] %s50
      %56 = dma.hbm_to_vmem [thread:$0]  %s3, 1024, %s51, [#allocation9], 256, 256, 16
    $region17: #{tpu_custom_call.1} parent=1 // pred_fallthru
      _
    // Predicated region
    $region18: #{tpu_custom_call.1} parent=1 // pred_check
      _
    $region19: #{tpu_custom_call.1} parent=1 // pred_check_branch
      %58 = sbr.rel (0) target = $region21
    $region20: #{tpu_custom_call.1} parent=1 // pred_region
      %59 = dma.done [#allocation3], 32
    $region21: #{tpu_custom_call.1} parent=1 // pred_fallthru
      _
    // Predicated region
    $region22: #{tpu_custom_call.1} parent=1 // pred_check
      _
    $region23: #{tpu_custom_call.1} parent=1 // pred_check_branch
      %61 = sbr.rel (0) target = $region25
    $region24: #{tpu_custom_call.1} parent=1 // pred_region
      %62 = dma.done [#allocation6], 32
    $region25: #{tpu_custom_call.1} parent=1 // pred_fallthru
      _
    // Predicated region
    $region26: #{tpu_custom_call.1} parent=1 // pred_check
      _
    $region27: #{tpu_custom_call.1} parent=1 // pred_check_branch
      %64 = sbr.rel (0) target = $region29
    $region28: #{tpu_custom_call.1} parent=1 // pred_region
      %65 = dma.done [#allocation6], 1024
    $region29: #{tpu_custom_call.1} parent=1 // pred_fallthru
      _
    // Predicated region
    $region30: #{tpu_custom_call.1} parent=1 // pred_check
      _
    $region31: #{tpu_custom_call.1} parent=1 // pred_check_branch
      %67 = sbr.rel (0) target = $region33
    $region32: #{tpu_custom_call.1} parent=1 // pred_region
      %68 = dma.done [#allocation9], 1024
    $region33: #{tpu_custom_call.1} parent=1 // pred_fallthru
      _
    %v69 = vld [vmem:[#allocation2] sm:$0x3]
    %v70 = vld [vmem:[#allocation7] sm:$0xff]
    %v71 = vld [vmem:[#allocation7 + $0x8] sm:$0xff]
    %v72 = vld [vmem:[#allocation7 + $0x10] sm:$0xff]
    %v73 = vld [vmem:[#allocation7 + $0x18] sm:$0xff]
    %v74 = vld [vmem:[#allocation7 + $0x20] sm:$0xff]
    %v75 = vld [vmem:[#allocation7 + $0x28] sm:$0xff]
    %v76 = vld [vmem:[#allocation7 + $0x30] sm:$0xff]
    %v77 = vld [vmem:[#allocation7 + $0x38] sm:$0xff]
    %vm78 = vcmask 261120
    %v80 = vsel %vm78, %v69, 0
    %82 = vmatprep.subr.mxu0 0.0
    %83 = vmatpush1.msra.mxu0 0.0
    %84 = vmatprep.subr.mxu0 0.0
    %85 = vmatpush1.msra.mxu0 0.0
    %86 = vmatprep.subr.mxu0 0.0
    %87 = vmatpush1.msra.mxu0 0.0
    %88 = vmatprep.subr.mxu0 0.0
    %89 = vmatpush1.msra.mxu0 0.0
    %90 = vmatprep.subr.mxu0 0.0
    %91 = vmatpush1.msra.mxu0 0.0
    %92 = vmatprep.subr.mxu0 0.0
    %93 = vmatpush1.msra.mxu0 0.0
    %94 = vmatprep.subr.mxu0 0.0
    %95 = vmatpush1.msra.mxu0 0.0
    %96 = vmatprep.subr.mxu0 0.0
    %97 = vmatpush1.msra.mxu0 0.0
    %98 = vmatprep.subr.mxu0 0.0
    %99 = vmatpush1.msra.mxu0 0.0
    %100 = vmatprep.subr.mxu0 0.0
    %101 = vmatpush1.msra.mxu0 0.0
    %102 = vmatprep.subr.mxu0 0.0
    %103 = vmatpush1.msra.mxu0 0.0
    %104 = vmatprep.subr.mxu0 0.0
    %105 = vmatpush1.msra.mxu0 0.0
    %106 = vmatprep.subr.mxu0 %v77
    %107 = vmatpush1.msra.mxu0 %v76
    %108 = vmatprep.subr.mxu0 %v75
    %109 = vmatpush1.msra.mxu0 %v74
    %110 = vmatprep.subr.mxu0 %v73
    %111 = vmatpush1.msra.mxu0 %v72
    %112 = vmatprep.subr.mxu0 %v71
    %113 = vmatpush1.msra.mxu0 %v70
    %114 = vmatprep.subr.mxu0 0.0
    %115 = vmatpush2.msra.mxu0 0.0
    %116 = vmatprep.subr.mxu0 0.0
    %117 = vmatpush2.msra.mxu0 0.0
    %118 = vmatprep.subr.mxu0 0.0
    %119 = vmatpush2.msra.mxu0 0.0
    %120 = vmatprep.subr.mxu0 0.0
    %121 = vmatpush2.msra.mxu0 0.0
    %122 = vmatprep.subr.mxu0 0.0
    %123 = vmatpush2.msra.mxu0 0.0
    %124 = vmatprep.subr.mxu0 0.0
    %125 = vmatpush2.msra.mxu0 0.0
    %126 = vmatprep.subr.mxu0 0.0
    %127 = vmatpush2.msra.mxu0 0.0
    %128 = vmatprep.subr.mxu0 0.0
    %129 = vmatpush2.msra.mxu0 0.0
    %130 = vmatprep.subr.mxu0 0.0
    %131 = vmatpush2.msra.mxu0 0.0
    %132 = vmatprep.subr.mxu0 0.0
    %133 = vmatpush2.msra.mxu0 0.0
    %134 = vmatprep.subr.mxu0 0.0
    %135 = vmatpush2.msra.mxu0 0.0
    %136 = vmatprep.subr.mxu0 0.0
    %137 = vmatpush2.msra.mxu0 0.0
    %138 = vmatprep.subr.mxu0 0.0
    %139 = vmatpush2.msra.mxu0 0.0
    %140 = vmatprep.subr.mxu0 0.0
    %141 = vmatpush2.msra.mxu0 0.0
    %142 = vmatprep.subr.mxu0 0.0
    %143 = vmatpush2.msra.mxu0 0.0
    %144 = vmatprep.subr.mxu0 0.0
    %145 = vmatpush2.msra.mxu0 0.0
    %146 = vmatprep.mubr.f32.mxu0 0.0
    %147 = vmatmul.mubr.f32.gmra.mxu0 %v80
    %v148 = vpop.f32.mrf.mxu0
    %v149 = vadd.f32 0.0, %v148
    %v150 = vpop.f32.mrf.mxu0
    %v151 = vadd.f32 0.0, %v150
    %152 = vdwg.mxu0
    %v153 = vld [vmem:[#allocation5] sm:$0x3]
    %v154 = vld [vmem:[#allocation8] sm:$0xff]
    %v155 = vld [vmem:[#allocation8 + $0x8] sm:$0xff]
    %v156 = vld [vmem:[#allocation8 + $0x10] sm:$0xff]
    %v157 = vld [vmem:[#allocation8 + $0x18] sm:$0xff]
    %v158 = vld [vmem:[#allocation8 + $0x20] sm:$0xff]
    %v159 = vld [vmem:[#allocation8 + $0x28] sm:$0xff]
    %v160 = vld [vmem:[#allocation8 + $0x30] sm:$0xff]
    %v161 = vld [vmem:[#allocation8 + $0x38] sm:$0xff]
    %v163 = vsel %vm78, %v153, 0
    %165 = vmatprep.subr.mxu0 0.0
    %166 = vmatpush1.msra.mxu0 0.0
    %167 = vmatprep.subr.mxu0 0.0
    %168 = vmatpush1.msra.mxu0 0.0
    %169 = vmatprep.subr.mxu0 0.0
    %170 = vmatpush1.msra.mxu0 0.0
    %171 = vmatprep.subr.mxu0 0.0
    %172 = vmatpush1.msra.mxu0 0.0
    %173 = vmatprep.subr.mxu0 0.0
    %174 = vmatpush1.msra.mxu0 0.0
    %175 = vmatprep.subr.mxu0 0.0
    %176 = vmatpush1.msra.mxu0 0.0
    %177 = vmatprep.subr.mxu0 0.0
    %178 = vmatpush1.msra.mxu0 0.0
    %179 = vmatprep.subr.mxu0 0.0
    %180 = vmatpush1.msra.mxu0 0.0
    %181 = vmatprep.subr.mxu0 0.0
    %182 = vmatpush1.msra.mxu0 0.0
    %183 = vmatprep.subr.mxu0 0.0
    %184 = vmatpush1.msra.mxu0 0.0
    %185 = vmatprep.subr.mxu0 0.0
    %186 = vmatpush1.msra.mxu0 0.0
    %187 = vmatprep.subr.mxu0 0.0
    %188 = vmatpush1.msra.mxu0 0.0
    %189 = vmatprep.subr.mxu0 %v161
    %190 = vmatpush1.msra.mxu0 %v160
    %191 = vmatprep.subr.mxu0 %v159
    %192 = vmatpush1.msra.mxu0 %v158
    %193 = vmatprep.subr.mxu0 %v157
    %194 = vmatpush1.msra.mxu0 %v156
    %195 = vmatprep.subr.mxu0 %v155
    %196 = vmatpush1.msra.mxu0 %v154
    %197 = vmatprep.subr.mxu0 0.0
    %198 = vmatpush2.msra.mxu0 0.0
    %199 = vmatprep.subr.mxu0 0.0
    %200 = vmatpush2.msra.mxu0 0.0
    %201 = vmatprep.subr.mxu0 0.0
    %202 = vmatpush2.msra.mxu0 0.0
    %203 = vmatprep.subr.mxu0 0.0
    %204 = vmatpush2.msra.mxu0 0.0
    %205 = vmatprep.subr.mxu0 0.0
    %206 = vmatpush2.msra.mxu0 0.0
    %207 = vmatprep.subr.mxu0 0.0
    %208 = vmatpush2.msra.mxu0 0.0
    %209 = vmatprep.subr.mxu0 0.0
    %210 = vmatpush2.msra.mxu0 0.0
    %211 = vmatprep.subr.mxu0 0.0
    %212 = vmatpush2.msra.mxu0 0.0
    %213 = vmatprep.subr.mxu0 0.0
    %214 = vmatpush2.msra.mxu0 0.0
    %215 = vmatprep.subr.mxu0 0.0
    %216 = vmatpush2.msra.mxu0 0.0
    %217 = vmatprep.subr.mxu0 0.0
    %218 = vmatpush2.msra.mxu0 0.0
    %219 = vmatprep.subr.mxu0 0.0
    %220 = vmatpush2.msra.mxu0 0.0
    %221 = vmatprep.subr.mxu0 0.0
    %222 = vmatpush2.msra.mxu0 0.0
    %223 = vmatprep.subr.mxu0 0.0
    %224 = vmatpush2.msra.mxu0 0.0
    %225 = vmatprep.subr.mxu0 0.0
    %226 = vmatpush2.msra.mxu0 0.0
    %227 = vmatprep.subr.mxu0 0.0
    %228 = vmatpush2.msra.mxu0 0.0
    %229 = vmatprep.mubr.f32.mxu0 0.0
    %230 = vmatmul.mubr.f32.gmra.mxu0 %v163
    %v231 = vpop.f32.mrf.mxu0
    %v232 = vadd.f32 0.0, %v231
    %v233 = vpop.f32.mrf.mxu0
    %v234 = vadd.f32 0.0, %v233
    %235 = vdwg.mxu0
    %v236 = vxor.u32 %v149, 2147483648
    %v237 = vxor.u32 %v151, 2147483648
    %v238 = vmul.f32 %v236, 1.442695
    %v239 = vpow.pop %v238
    %v240 = vmul.f32 %v237, 1.442695
    %v241 = vpow.pop %v240
    %v242 = vadd.f32 %v239, 1.0
    %v243 = vadd.f32 %v241, 1.0
    %v244 = vrcp.pop %v242
    %v245 = vmul.f32 1.0, %v244
    %v246 = vrcp.pop %v243
    %v247 = vmul.f32 1.0, %v246
    %v248 = vxor.u32 %v232, 2147483648
    %v249 = vxor.u32 %v234, 2147483648
    %v250 = vmul.f32 %v248, 1.442695
    %v251 = vpow.pop %v250
    %v252 = vmul.f32 %v249, 1.442695
    %v253 = vpow.pop %v252
    %v254 = vadd.f32 %v251, 1.0
    %v255 = vadd.f32 %v253, 1.0
    %v256 = vrcp.pop %v254
    %v257 = vmul.f32 1.0, %v256
    %v258 = vrcp.pop %v255
    %v259 = vmul.f32 1.0, %v258
    %v260 = vadd.f32 %v245, %v257
    %v261 = vadd.f32 %v247, %v259
    %v262 = vmul.f32 %v260, 0.1
    %v263 = vmul.f32 %v261, 0.1
    %v266 = vcombine.low %v262, %v263
    %v268 = vunpack.c.l.s4 1983009808
    %v269 = vunpack.c.0.s8 %v268
    %v270 = vlaneseq
    %v271 = vshrl.u32 %v270, 7
    %v272 = vsub.s32 %v269, %v271
    %v273 = vrot.slane %v266, %v272
    %275 = vst [vmem:[#allocation10] sm:$0xf] %v273
    // Predicated region
    $region34: #{tpu_custom_call.1} parent=1 // pred_check
      _
    $region35: #{tpu_custom_call.1} parent=1 // pred_check_branch
      %277 = sbr.rel (0) target = $region37
    $region36: #{tpu_custom_call.1} parent=1 // pred_region
      %s279 = ssub.s32 64, 64
      %280 = vsyncadd [#allocation4], %s279
      %s282 = sshll.u32 [#allocation10], 4
      %s283 = int_to_ptr.vmem [resolvable:$true] %s282
      %285 = dma.vmem_to_hbm [thread:$0]  %s283, 64, %s4, [#allocation4]
    $region37: #{tpu_custom_call.1} parent=1 // pred_fallthru
      _
    // Predicated region
    $region38: #{tpu_custom_call.1} parent=1 // pred_check
      _
    $region39: #{tpu_custom_call.1} parent=1 // pred_check_branch
      %287 = sbr.rel (0) target = $region41
    $region40: #{tpu_custom_call.1} parent=1 // pred_region
      %288 = dma.done [#allocation4], 64
    $region41: #{tpu_custom_call.1} parent=1 // pred_fallthru
      _
    %289 = vsyncpa [#allocation3], 1
    %290 = vsyncpa [#allocation6], 1
    %291 = vsyncpa [#allocation9], 1
    %292 = vsyncpa [#allocation4], 1

</llo_original>
